<compile_context>
chip_gen: v7x
topology: tpu7x:2x2x1
jax: 0.10.0
libtpu: 0.0.40
codegen_flags: <defaults>
</compile_context>

<pallas_src>
import functools

import jax
import jax.numpy as jnp
from jax.experimental import pallas as pl
from jax.experimental.pallas import tpu as pltpu

N_ATOMS = 16        # atoms across the batch (toy size)
N_MOL = 2           # molecules; only used to build the (unused) `batch` input
MAX_Z = 10          # atom-type vocabulary (rows of the atomref embedding)

LANES = 128         # atoms per lane row (vreg lane width)
TILE_R = 512        # row-tile size; sweep 512-2048 at production N (VMEM-safe on all gens)


def _atomref_kernel(max_z, aref_ref, x_ref, z_ref, y_ref):
    """y = x + atomref[z] on a (tile_r, 128) lane-dense atom slab.

    aref_ref            : (max_z,) f32 in SMEM (scalar-prefetched once, resident)
    x_ref, z_ref, y_ref : (tile_r, LANES) VMEM tiles
    """
    z = z_ref[...]                                   # (tile_r, LANES) int32
    aref_z = jnp.zeros(z.shape, jnp.float32)
    # Unrolled select chain over the tiny table (max_z ~ O(10)).  Padded /
    # out-of-range z matches no branch, falls through to 0.0, and those lanes
    # are discarded in the wrapper anyway.
    for k in range(max_z):
        aref_z = jnp.where(z == k, aref_ref[k], aref_z)
    y_ref[...] = x_ref[...] + aref_z                 # full-lane unmasked stores


def atomref_forward(x, z, pos, batch, atomref_weight):
    """Pallas equivalent of Atomref.forward(x, z, pos, batch)."""
    del pos, batch  # unused by Atomref.forward, kept for signature parity

    n = x.shape[0]
    max_z = atomref_weight.shape[0]
    assert max_z >= 1

    # Lane-dense 2-D packing: atoms -> (rows, 128); rows tiled by tile_r.
    n_rows = -(-n // LANES)
    tile_r = min(TILE_R, n_rows)
    n_rows_pad = -(-n_rows // tile_r) * tile_r
    n_pad = n_rows_pad * LANES

    x_pad = jnp.pad(x.reshape(-1).astype(jnp.float32), (0, n_pad - n))
    # Pad z with max_z: matches no select branch -> contributes exactly 0.0.
    # TODO(synk): z could be narrowed to int16/int8 in HBM to shave ~25% traffic.
    z_pad = jnp.pad(z.astype(jnp.int32), (0, n_pad - n), constant_values=max_z)
    x2d = x_pad.reshape(n_rows_pad, LANES)
    z2d = z_pad.reshape(n_rows_pad, LANES)
    aref_flat = atomref_weight.reshape(-1).astype(jnp.float32)     # (max_z,)

    grid = (n_rows_pad // tile_r,)
    y2d = pl.pallas_call(
        functools.partial(_atomref_kernel, max_z),
        out_shape=jax.ShapeDtypeStruct((n_rows_pad, LANES), jnp.float32),
        grid_spec=pltpu.PrefetchScalarGridSpec(
            num_scalar_prefetch=1,                   # atomref table -> SMEM, once
            grid=grid,
            in_specs=[
                pl.BlockSpec((tile_r, LANES), lambda i, aref: (i, 0)),   # x tile
                pl.BlockSpec((tile_r, LANES), lambda i, aref: (i, 0)),   # z tile
            ],
            out_specs=pl.BlockSpec((tile_r, LANES), lambda i, aref: (i, 0)),
        ),
        compiler_params=pltpu.CompilerParams(
            dimension_semantics=("parallel",)),      # shards row tiles across v7x TCs
    )(aref_flat, x2d, z2d)

    return y2d.reshape(-1)[:n][:, None]              # back to (N, 1)


if __name__ == "__main__":
    key = jax.random.PRNGKey(0)
    k_aref, k_x, k_z, k_pos = jax.random.split(key, 4)

    # Atomref table: stands in for dataset.get_atomref() (zeros would make the
    # test trivial); semantics are identical — an nn.Embedding(MAX_Z, 1) lookup.
    atomref_weight = jax.random.normal(k_aref, (MAX_Z, 1), dtype=jnp.float32) * 0.5
    x = jax.random.normal(k_x, (N_ATOMS, 1), dtype=jnp.float32)           # atomwise predictions
    z = jax.random.randint(k_z, (N_ATOMS,), 0, MAX_Z, dtype=jnp.int32)    # atom types
    pos = jax.random.normal(k_pos, (N_ATOMS, 3), dtype=jnp.float32)       # unused by Atomref
    batch = jnp.repeat(jnp.arange(N_MOL, dtype=jnp.int32), N_ATOMS // N_MOL)  # unused by Atomref

    y = atomref_forward(x, z, pos, batch, atomref_weight)
    y = jax.block_until_ready(y)

    y_ref = x + atomref_weight[z]            # PyTorch: x + self.atomref(z)
    assert y.shape == (N_ATOMS, 1)
    assert jnp.allclose(y, y_ref, atol=1e-6, rtol=1e-6), (y, y_ref)

    print("KERNEL_OK")
</pallas_src>

<mosaic_0001>
module attributes {stable_mosaic.version = 11 : i64} {
  func.func @_atomref_kernel(%arg0: i32, %arg1: memref<10xf32, #tpu.memory_space<smem>>, %arg2: memref<1x128xf32, #tpu.memory_space<vmem>>, %arg3: memref<1x128xi32, #tpu.memory_space<vmem>>, %arg4: memref<1x128xf32, #tpu.memory_space<vmem>>) attributes {dimension_semantics = [#tpu.dimension_semantics<parallel>], iteration_bounds = array<i64: 1>, scalar_prefetch = 1 : i64, scratch_operands = 0 : i64, tpu.core_type = #tpu.core_type<tc>, window_params = [{transform_indices = @transform_0, window_bounds = array<i64: 1, 128>}, {transform_indices = @transform_1, window_bounds = array<i64: 1, 128>}, {transform_indices = @transform_2, window_bounds = array<i64: 1, 128>}]} {
    %c0 = arith.constant 0 : index
    %c0_0 = arith.constant 0 : index
    %0 = vector.load %arg3[%c0, %c0_0] : memref<1x128xi32, #tpu.memory_space<vmem>>, vector<1x128xi32>
    %cst = arith.constant 0.000000e+00 : f32
    %1 = vector.broadcast %cst : f32 to vector<1x128xf32>
    %c0_i32 = arith.constant 0 : i32
    %2 = vector.broadcast %c0_i32 : i32 to vector<1x128xi32>
    %3 = arith.cmpi eq, %0, %2 : vector<1x128xi32>
    %c0_1 = arith.constant 0 : index
    %4 = memref.load %arg1[%c0_1] : memref<10xf32, #tpu.memory_space<smem>>
    %5 = vector.broadcast %4 : f32 to vector<1x128xf32>
    %6 = arith.select %3, %5, %1 : vector<1x128xi1>, vector<1x128xf32>
    %c1_i32 = arith.constant 1 : i32
    %7 = vector.broadcast %c1_i32 : i32 to vector<1x128xi32>
    %8 = arith.cmpi eq, %0, %7 : vector<1x128xi32>
    %c1 = arith.constant 1 : index
    %9 = memref.load %arg1[%c1] : memref<10xf32, #tpu.memory_space<smem>>
    %10 = vector.broadcast %9 : f32 to vector<1x128xf32>
    %11 = arith.select %8, %10, %6 : vector<1x128xi1>, vector<1x128xf32>
    %c2_i32 = arith.constant 2 : i32
    %12 = vector.broadcast %c2_i32 : i32 to vector<1x128xi32>
    %13 = arith.cmpi eq, %0, %12 : vector<1x128xi32>
    %c2 = arith.constant 2 : index
    %14 = memref.load %arg1[%c2] : memref<10xf32, #tpu.memory_space<smem>>
    %15 = vector.broadcast %14 : f32 to vector<1x128xf32>
    %16 = arith.select %13, %15, %11 : vector<1x128xi1>, vector<1x128xf32>
    %c3_i32 = arith.constant 3 : i32
    %17 = vector.broadcast %c3_i32 : i32 to vector<1x128xi32>
    %18 = arith.cmpi eq, %0, %17 : vector<1x128xi32>
    %c3 = arith.constant 3 : index
    %19 = memref.load %arg1[%c3] : memref<10xf32, #tpu.memory_space<smem>>
    %20 = vector.broadcast %19 : f32 to vector<1x128xf32>
    %21 = arith.select %18, %20, %16 : vector<1x128xi1>, vector<1x128xf32>
    %c4_i32 = arith.constant 4 : i32
    %22 = vector.broadcast %c4_i32 : i32 to vector<1x128xi32>
    %23 = arith.cmpi eq, %0, %22 : vector<1x128xi32>
    %c4 = arith.constant 4 : index
    %24 = memref.load %arg1[%c4] : memref<10xf32, #tpu.memory_space<smem>>
    %25 = vector.broadcast %24 : f32 to vector<1x128xf32>
    %26 = arith.select %23, %25, %21 : vector<1x128xi1>, vector<1x128xf32>
    %c5_i32 = arith.constant 5 : i32
    %27 = vector.broadcast %c5_i32 : i32 to vector<1x128xi32>
    %28 = arith.cmpi eq, %0, %27 : vector<1x128xi32>
    %c5 = arith.constant 5 : index
    %29 = memref.load %arg1[%c5] : memref<10xf32, #tpu.memory_space<smem>>
    %30 = vector.broadcast %29 : f32 to vector<1x128xf32>
    %31 = arith.select %28, %30, %26 : vector<1x128xi1>, vector<1x128xf32>
    %c6_i32 = arith.constant 6 : i32
    %32 = vector.broadcast %c6_i32 : i32 to vector<1x128xi32>
    %33 = arith.cmpi eq, %0, %32 : vector<1x128xi32>
    %c6 = arith.constant 6 : index
    %34 = memref.load %arg1[%c6] : memref<10xf32, #tpu.memory_space<smem>>
    %35 = vector.broadcast %34 : f32 to vector<1x128xf32>
    %36 = arith.select %33, %35, %31 : vector<1x128xi1>, vector<1x128xf32>
    %c7_i32 = arith.constant 7 : i32
    %37 = vector.broadcast %c7_i32 : i32 to vector<1x128xi32>
    %38 = arith.cmpi eq, %0, %37 : vector<1x128xi32>
    %c7 = arith.constant 7 : index
    %39 = memref.load %arg1[%c7] : memref<10xf32, #tpu.memory_space<smem>>
    %40 = vector.broadcast %39 : f32 to vector<1x128xf32>
    %41 = arith.select %38, %40, %36 : vector<1x128xi1>, vector<1x128xf32>
    %c8_i32 = arith.constant 8 : i32
    %42 = vector.broadcast %c8_i32 : i32 to vector<1x128xi32>
    %43 = arith.cmpi eq, %0, %42 : vector<1x128xi32>
    %c8 = arith.constant 8 : index
    %44 = memref.load %arg1[%c8] : memref<10xf32, #tpu.memory_space<smem>>
    %45 = vector.broadcast %44 : f32 to vector<1x128xf32>
    %46 = arith.select %43, %45, %41 : vector<1x128xi1>, vector<1x128xf32>
    %c9_i32 = arith.constant 9 : i32
    %47 = vector.broadcast %c9_i32 : i32 to vector<1x128xi32>
    %48 = arith.cmpi eq, %0, %47 : vector<1x128xi32>
    %c9 = arith.constant 9 : index
    %49 = memref.load %arg1[%c9] : memref<10xf32, #tpu.memory_space<smem>>
    %50 = vector.broadcast %49 : f32 to vector<1x128xf32>
    %51 = arith.select %48, %50, %46 : vector<1x128xi1>, vector<1x128xf32>
    %c0_2 = arith.constant 0 : index
    %c0_3 = arith.constant 0 : index
    %52 = vector.load %arg2[%c0_2, %c0_3] : memref<1x128xf32, #tpu.memory_space<vmem>>, vector<1x128xf32>
    %53 = arith.addf %52, %51 : vector<1x128xf32>
    %c0_4 = arith.constant 0 : index
    %c0_5 = arith.constant 0 : index
    %54 = vector.load %arg4[%c0_4, %c0_5] : memref<1x128xf32, #tpu.memory_space<vmem>>, vector<1x128xf32>
    tpu.vector_store %arg4[%c0_4, %c0_5], %53 {strides = array<i32>} : memref<1x128xf32, #tpu.memory_space<vmem>>, vector<1x128xf32>,
    return
  }
  func.func @transform_0(%arg0: i32, %arg1: memref<10xf32, #tpu.memory_space<smem>>) -> (i32, i32) {
    %c0_i32 = arith.constant 0 : i32
    %c0_i32_0 = arith.constant 0 : i32
    return %arg0, %c0_i32 : i32, i32
  }
  func.func @transform_1(%arg0: i32, %arg1: memref<10xf32, #tpu.memory_space<smem>>) -> (i32, i32) {
    %c0_i32 = arith.constant 0 : i32
    %c0_i32_0 = arith.constant 0 : i32
    return %arg0, %c0_i32 : i32, i32
  }
  func.func @transform_2(%arg0: i32, %arg1: memref<10xf32, #tpu.memory_space<smem>>) -> (i32, i32) {
    %c0_i32 = arith.constant 0 : i32
    %c0_i32_0 = arith.constant 0 : i32
    return %arg0, %c0_i32 : i32, i32
  }
}

</mosaic_0001>

<llo_original>
// kernel: tpu_custom_call.1
$region0: #{tpu_custom_call.1}
  #allocation0 [shape = 'u32[]', space=smem, size = 0x4, offset = 0x4, fixed_abs, tag = 'smem constant byte address 0x4 - core index']
  #allocation1 [shape = 'u32[144,128]{1,0:T(1,128)}', space=vmem, size = 0x12000, scoped, tag = 'internal scratch']
  #allocation2 [shape = 's32[1]{0}', space=sflag, size = 0x4, scoped, tag = 'scoped memory for tpu_custom_call.1']
  #allocation3 [shape = 'u8[512]{0}', space=smem, size = 0x200, scoped, tag = 'prefetched SMEM operand 0']
  %s0 = inlined_call_operand.hbm [shape: f32[10], index: 0, kind: input, shape index: {}]
  %s1 = inlined_call_operand.vmem [shape: f32[1,128], index: 1, kind: input, shape index: {}]
  %s2 = inlined_call_operand.vmem [shape: s32[1,128], index: 2, kind: input, shape index: {}]
  %s3 = inlined_call_operand.hbm [shape: f32[1,128], index: 3, kind: output, shape index: {}]
  %s4 = sld [smem:[#allocation0]]
  $region18: #{tpu_custom_call.1} parent=0
    _
  %s6 = ssub.s32 1, %s4
  %s7 = scalar_select 0, %s6, %s4
  %9 = dma.hbm_to_smem %s0, 16, [#allocation3], [#allocation2]
  %10 = dma.done [#allocation2], 16
  %11 = sfence
  $region1: #{tpu_custom_call.1} parent=0
    #allocation4 [shape = 'u8[512]{0}', space=vmem, size = 0x400, scoped, tag = 'output window, operand 0, single buffered']
    #allocation5 [shape = 's32[1]{0}', space=sflag, size = 0x4, scoped, tag = 'scoped memory for tpu_custom_call.1']
    %12 = vsyncpa [#allocation5], 0
    // Predicated region
    $region2: #{tpu_custom_call.1} parent=1 // pred_check
      _
    $region3: #{tpu_custom_call.1} parent=1 // pred_check_branch
      %14 = sbr.rel (0) target = $region5
    $region4: #{tpu_custom_call.1} parent=1 // pred_region
      _
    $region5: #{tpu_custom_call.1} parent=1 // pred_fallthru
      _
    // Predicated region
    $region6: #{tpu_custom_call.1} parent=1 // pred_check
      _
    $region7: #{tpu_custom_call.1} parent=1 // pred_check_branch
      %16 = sbr.rel (0) target = $region9
    $region8: #{tpu_custom_call.1} parent=1 // pred_region
      _
    $region9: #{tpu_custom_call.1} parent=1 // pred_fallthru
      _
    %v17 = vld [vmem:[%s2] sm:$0x1]
    %vm18 = vcmp.eq.s32.totalorder %v17, 0
    %s19 = sld [smem:[#allocation3]]
    %v20 = vstv %s19
    %v21 = vsel %vm18, %v20, 0.0
    %vm22 = vcmp.eq.s32.totalorder %v17, 1
    %s23 = sld [smem:[#allocation3 + $0x1]]
    %v24 = vstv %s23
    %v25 = vsel %vm22, %v24, %v21
    %vm26 = vcmp.eq.s32.totalorder %v17, 2
    %s27 = sld [smem:[#allocation3 + $0x2]]
    %v28 = vstv %s27
    %v29 = vsel %vm26, %v28, %v25
    %vm30 = vcmp.eq.s32.totalorder %v17, 3
    %s31 = sld [smem:[#allocation3 + $0x3]]
    %v32 = vstv %s31
    %v33 = vsel %vm30, %v32, %v29
    %vm34 = vcmp.eq.s32.totalorder %v17, 4
    %s35 = sld [smem:[#allocation3 + $0x4]]
    %v36 = vstv %s35
    %v37 = vsel %vm34, %v36, %v33
    %vm38 = vcmp.eq.s32.totalorder %v17, 5
    %s39 = sld [smem:[#allocation3 + $0x5]]
    %v40 = vstv %s39
    %v41 = vsel %vm38, %v40, %v37
    %vm42 = vcmp.eq.s32.totalorder %v17, 6
    %s43 = sld [smem:[#allocation3 + $0x6]]
    %v44 = vstv %s43
    %v45 = vsel %vm42, %v44, %v41
    %vm46 = vcmp.eq.s32.totalorder %v17, 7
    %s47 = sld [smem:[#allocation3 + $0x7]]
    %v48 = vstv %s47
    %v49 = vsel %vm46, %v48, %v45
    %vm50 = vcmp.eq.s32.totalorder %v17, 8
    %s51 = sld [smem:[#allocation3 + $0x8]]
    %v52 = vstv %s51
    %v53 = vsel %vm50, %v52, %v49
    %vm54 = vcmp.eq.s32.totalorder %v17, 9
    %s55 = sld [smem:[#allocation3 + $0x9]]
    %v56 = vstv %s55
    %v57 = vsel %vm54, %v56, %v53
    %v58 = vld [vmem:[%s1] sm:$0x1]
    %v59 = vadd.f32 %v58, %v57
    %60 = vst [vmem:[#allocation4] sm:$0x1] %v59
    // Predicated region
    $region10: #{tpu_custom_call.1} parent=1 // pred_check
      _
    $region11: #{tpu_custom_call.1} parent=1 // pred_check_branch
      %62 = sbr.rel (0) target = $region13
    $region12: #{tpu_custom_call.1} parent=1 // pred_region
      %s64 = ssub.s32 16, 16
      %65 = vsyncadd [#allocation5], %s64
      %s67 = sshll.u32 [#allocation4], 4
      %s68 = int_to_ptr.vmem [resolvable:$true] %s67
      %70 = dma.vmem_to_hbm [thread:$0]  %s68, 16, %s3, [#allocation5]
    $region13: #{tpu_custom_call.1} parent=1 // pred_fallthru
      _
    // Predicated region
    $region14: #{tpu_custom_call.1} parent=1 // pred_check
      _
    $region15: #{tpu_custom_call.1} parent=1 // pred_check_branch
      %72 = sbr.rel (0) target = $region17
    $region16: #{tpu_custom_call.1} parent=1 // pred_region
      %73 = dma.done [#allocation5], 16
    $region17: #{tpu_custom_call.1} parent=1 // pred_fallthru
      _
    %74 = vsyncpa [#allocation5], 1

</llo_original>
